<compile_context>
chip_gen: v7x
topology: tpu7x:2x2x1
jax: 0.10.0
libtpu: 0.0.40
codegen_flags: <defaults>
</compile_context>

<pallas_src>
import inspect
import warnings

import jax
import jax.numpy as jnp
from jax.experimental import pallas as pl
from jax.experimental.pallas import tpu as pltpu

LN_EPS = 1e-5  # PyTorch nn.LayerNorm default


def _round_up(x, m):
    return (x + m - 1) // m * m


def _supports_buffered_blockspec():
    """Explicit capability check for pl.BlockSpec(..., pipeline_mode=pl.Buffered(n))."""
    if not hasattr(pl, "Buffered"):
        return False
    try:
        return "pipeline_mode" in inspect.signature(pl.BlockSpec).parameters
    except (TypeError, ValueError):
        return False


_HAS_BUFFERED = _supports_buffered_blockspec()


def _tpu_vmem_capacity_bytes():
    """Physical VMEM per TensorCore: 128 MiB on v5e/v6e, 64 MiB on v7x."""
    if hasattr(pltpu, "get_tpu_info"):
        try:
            return int(pltpu.get_tpu_info().vmem_capacity_bytes)
        except Exception:
            pass
    return 64 * 1024 * 1024  # conservative (v7x-sized) default


def _bert_output_kernel(h_ref, x_ref, w_ref, b_ref, g_ref, beta_ref, o_ref):
    # h_ref: (tile_rows, I)   hidden_states tile (any float dtype)
    # x_ref: (tile_rows, H)   residual (input_tensor) tile
    # w_ref: (I, H)           dense weight (transposed vs. PyTorch (H, I)); bf16 on deploy path
    # b_ref, g_ref, beta_ref: (1, H)
    # o_ref: (tile_rows, H)
    #
    # Cast the activation tile to the weight dtype right before the MXU op:
    # per-tile VPU cast hidden under the pipeline (no wrapper-side astype pass).
    a = h_ref[...].astype(w_ref.dtype)
    y = jnp.dot(a, w_ref[...], preferred_element_type=jnp.float32)
    # dropout (p=0.1) is identity in eval mode.
    # Bias + residual add in f32.
    y = y + x_ref[...].astype(jnp.float32) + b_ref[...].astype(jnp.float32)
    # LayerNorm over the last (hidden) axis, in f32.
    mean = jnp.mean(y, axis=-1, keepdims=True)
    centered = y - mean
    var = jnp.mean(centered * centered, axis=-1, keepdims=True)
    out = (centered * jax.lax.rsqrt(var + LN_EPS)) * g_ref[...].astype(jnp.float32) \
        + beta_ref[...].astype(jnp.float32)
    o_ref[...] = out.astype(o_ref.dtype)


def bert_output_forward(hidden_states, input_tensor, w, b, gamma, beta, *,
                        mxu_dtype=jnp.bfloat16, tile_rows=None,
                        vmem_limit_bytes=None):
    """hidden_states: (B, S, I); input_tensor: (B, S, H) -> (B, S, H).

    mxu_dtype: dtype for the MXU operands (weight; the activation tile is cast
    to the weight dtype in-kernel). Default bf16 — the MXU-native format on
    v5e/v6e/v7x. Ideally the caller passes the weight already in this dtype
    (cast once at load time) so the wrapper-side cast below is a no-op.
    Accumulation, bias, residual and LayerNorm stay in f32.
    """
    B, S, I = hidden_states.shape
    H = input_tensor.shape[-1]
    rows = B * S
    out_dtype = hidden_states.dtype

    # Fallback weight cast (small (I, H) tensor); prefer casting at load time.
    if mxu_dtype is not None and w.dtype != jnp.dtype(mxu_dtype):
        w = w.astype(mxu_dtype)

    h2 = hidden_states.reshape(rows, I)
    x2 = input_tensor.reshape(rows, H)
    b2 = b.reshape(1, H)
    g2 = gamma.reshape(1, H)
    beta2 = beta.reshape(1, H)

    vmem_phys = _tpu_vmem_capacity_bytes()
    if vmem_limit_bytes is None:
        # ~75% of physical VMEM, leaving headroom for Mosaic internal scratch:
        # 96 MiB on v5e/v6e (128 MiB physical), 48 MiB on v7x (64 MiB physical).
        vmem_limit_bytes = min(vmem_phys * 3 // 4, 96 * 1024 * 1024)

    # Sublane alignment: 8 rows for 32-bit streams, 16 if any stream is 16-bit.
    bits16 = any(jnp.dtype(d).itemsize == 2
                 for d in (h2.dtype, x2.dtype, w.dtype, out_dtype))
    sub = 16 if bits16 else 8

    if tile_rows is None:
        # Bigger row tiles on 128 MiB-VMEM parts (v5e/v6e); 512 on v7x (64 MiB).
        tile_rows = 1024 if vmem_phys >= 96 * 1024 * 1024 else 512
    tile_rows = max(sub, min(_round_up(tile_rows, sub), _round_up(rows, sub)))

    # v7x megacore: prefer an even number of row tiles so the 'parallel' axis
    # splits evenly across the two TensorCores.
    n_tiles = pl.cdiv(rows, tile_rows)
    if n_tiles > 1 and n_tiles % 2 == 1:
        cand = max(sub, _round_up(pl.cdiv(rows, n_tiles + 1), sub))
        if pl.cdiv(rows, cand) % 2 == 0:
            tile_rows = cand
            n_tiles = pl.cdiv(rows, cand)

    grid = (n_tiles,)

    def run(weight_spec):
        return pl.pallas_call(
            _bert_output_kernel,
            out_shape=jax.ShapeDtypeStruct((rows, H), out_dtype),
            grid_spec=pltpu.PrefetchScalarGridSpec(
                num_scalar_prefetch=0,
                grid=grid,
                in_specs=[
                    pl.BlockSpec((tile_rows, I), lambda i: (i, 0)),  # hidden_states tile
                    pl.BlockSpec((tile_rows, H), lambda i: (i, 0)),  # residual tile
                    weight_spec,                                     # dense weight (full, resident)
                    pl.BlockSpec((1, H), lambda i: (0, 0)),          # dense bias
                    pl.BlockSpec((1, H), lambda i: (0, 0)),          # LN gamma
                    pl.BlockSpec((1, H), lambda i: (0, 0)),          # LN beta
                ],
                out_specs=pl.BlockSpec((tile_rows, H), lambda i: (i, 0)),
            ),
            compiler_params=pltpu.CompilerParams(
                dimension_semantics=("parallel",),
                vmem_limit_bytes=vmem_limit_bytes),
        )(h2, x2, w, b2, g2, beta2)

    default_w_spec = pl.BlockSpec((I, H), lambda i: (0, 0))
    if _HAS_BUFFERED:
        # Grid-invariant weight: request single buffering so a BERT-scale (I, H)
        # weight is not double-buffered in VMEM (matters on v7x's 64 MiB VMEM).
        try:
            out = run(pl.BlockSpec((I, H), lambda i: (0, 0),
                                   pipeline_mode=pl.Buffered(1)))
        except Exception as e:  # logged, not silent: fallback doubles weight VMEM
            warnings.warn(
                "pl.Buffered(1) weight spec rejected "
                f"({type(e).__name__}: {e}); falling back to the default "
                "(double-buffered) weight BlockSpec.")
            out = run(default_w_spec)
    else:
        out = run(default_w_spec)

    return out.reshape(B, S, H)


if __name__ == "__main__":
    # Small shapes consistent with the module's forward.
    B, S = 2, 8
    hidden_size = 32
    intermediate_size = 64

    key = jax.random.PRNGKey(0)
    k1, k2, k3, k4 = jax.random.split(key, 4)

    # Inputs
    hidden_states = jax.random.normal(k1, (B, S, intermediate_size), dtype=jnp.float32)
    input_tensor = jax.random.normal(k2, (B, S, hidden_size), dtype=jnp.float32)

    # Deterministic parameter init (synthetic, not a checkpoint).
    # PyTorch nn.Linear weight is (H, I); we store the transpose (I, H) for x @ W.
    w_f32 = jax.random.normal(k3, (intermediate_size, hidden_size), dtype=jnp.float32) * 0.02
    b = jax.random.normal(k4, (hidden_size,), dtype=jnp.float32) * 0.02
    gamma = jnp.ones((hidden_size,), dtype=jnp.float32)   # LayerNorm weight
    beta = jnp.zeros((hidden_size,), dtype=jnp.float32)   # LayerNorm bias

    # "Load-time" bf16 weight for the default deployment path (cast once, outside per-call path).
    w_bf16 = w_f32.astype(jnp.bfloat16)

    # Reference in plain JAX (same math as the PyTorch eval forward), all f32.
    y_ref = jnp.einsum("bsi,ih->bsh", hidden_states, w_f32) + b
    y_ref = y_ref + input_tensor
    mu = jnp.mean(y_ref, axis=-1, keepdims=True)
    var = jnp.mean((y_ref - mu) ** 2, axis=-1, keepdims=True)
    y_ref = (y_ref - mu) / jnp.sqrt(var + LN_EPS) * gamma + beta

    # 1) strict f32 MXU path (precision check).
    out_f32 = bert_output_forward(hidden_states, input_tensor, w_f32, b, gamma, beta,
                                  mxu_dtype=jnp.float32)
    jax.block_until_ready(out_f32)
    assert jnp.allclose(out_f32, y_ref, atol=1e-5, rtol=1e-5), "f32 path mismatch vs reference"

    # 2) default deployment path: bf16 MXU operands (bf16 weight, in-kernel bf16 cast of the
    #    activation tile), f32 accumulation + f32 bias/residual/LayerNorm, f32 output.
    out_bf16 = bert_output_forward(hidden_states, input_tensor, w_bf16, b, gamma, beta)
    jax.block_until_ready(out_bf16)
    assert jnp.allclose(out_bf16, y_ref, atol=5e-2, rtol=5e-2), "bf16-MXU path mismatch vs reference"

    # 3) fully bf16 activation streams (residual read + output write in bf16, LN math in f32):
    #    the HBM-bound v6e path.
    out_bf16_io = bert_output_forward(hidden_states.astype(jnp.bfloat16),
                                      input_tensor.astype(jnp.bfloat16),
                                      w_bf16, b, gamma, beta)
    jax.block_until_ready(out_bf16_io)
    assert jnp.allclose(out_bf16_io.astype(jnp.float32), y_ref, atol=1e-1, rtol=1e-1), \
        "bf16-IO path mismatch vs reference"

    print("KERNEL_OK")
</pallas_src>

<mosaic_0001>
module attributes {stable_mosaic.version = 11 : i64} {
  func.func @_bert_output_kernel(%arg0: i32, %arg1: memref<16x64xf32, #tpu.memory_space<vmem>>, %arg2: memref<16x32xf32, #tpu.memory_space<vmem>>, %arg3: memref<64x32xf32, #tpu.memory_space<vmem>>, %arg4: memref<1x32xf32, #tpu.memory_space<vmem>>, %arg5: memref<1x32xf32, #tpu.memory_space<vmem>>, %arg6: memref<1x32xf32, #tpu.memory_space<vmem>>, %arg7: memref<16x32xf32, #tpu.memory_space<vmem>>) attributes {dimension_semantics = [#tpu.dimension_semantics<parallel>], iteration_bounds = array<i64: 1>, scalar_prefetch = 0 : i64, scratch_operands = 0 : i64, tpu.core_type = #tpu.core_type<tc>, window_params = [{transform_indices = @transform_0, window_bounds = array<i64: 16, 64>}, {transform_indices = @transform_1, window_bounds = array<i64: 16, 32>}, {pipeline_mode = #tpu.pipeline_mode<synchronous>, transform_indices = @transform_2, window_bounds = array<i64: 64, 32>}, {pipeline_mode = #tpu.pipeline_mode<synchronous>, transform_indices = @transform_3, window_bounds = array<i64: 1, 32>}, {pipeline_mode = #tpu.pipeline_mode<synchronous>, transform_indices = @transform_4, window_bounds = array<i64: 1, 32>}, {pipeline_mode = #tpu.pipeline_mode<synchronous>, transform_indices = @transform_5, window_bounds = array<i64: 1, 32>}, {transform_indices = @transform_6, window_bounds = array<i64: 16, 32>}]} {
    %c0 = arith.constant 0 : index
    %c0_0 = arith.constant 0 : index
    %0 = vector.load %arg1[%c0, %c0_0] : memref<16x64xf32, #tpu.memory_space<vmem>>, vector<16x64xf32>
    %c0_1 = arith.constant 0 : index
    %c0_2 = arith.constant 0 : index
    %1 = vector.load %arg3[%c0_1, %c0_2] : memref<64x32xf32, #tpu.memory_space<vmem>>, vector<64x32xf32>
    %cst = arith.constant dense<0.000000e+00> : vector<16x32xf32>
    %2 = tpu.matmul %0, %1, %cst {dimension_numbers = #tpu.dot_dimension_numbers<[1], [0], [0], [1], [0, 0, 1, 1], [], []>} : vector<16x64xf32>, vector<64x32xf32>, vector<16x32xf32> -> vector<16x32xf32>
    %c0_3 = arith.constant 0 : index
    %c0_4 = arith.constant 0 : index
    %3 = vector.load %arg2[%c0_3, %c0_4] : memref<16x32xf32, #tpu.memory_space<vmem>>, vector<16x32xf32>
    %4 = arith.addf %2, %3 : vector<16x32xf32>
    %c0_5 = arith.constant 0 : index
    %c0_6 = arith.constant 0 : index
    %5 = vector.load %arg4[%c0_5, %c0_6] : memref<1x32xf32, #tpu.memory_space<vmem>>, vector<1x32xf32>
    %6 = vector.broadcast %5 : vector<1x32xf32> to vector<16x32xf32>
    %7 = arith.addf %4, %6 : vector<16x32xf32>
    %cst_7 = arith.constant dense<0.000000e+00> : vector<16xf32>
    %8 = vector.multi_reduction <add>, %7, %cst_7 [1] : vector<16x32xf32> to vector<16xf32>
    %9 = vector.shape_cast %8 : vector<16xf32> to vector<16x1xf32>
    %cst_8 = arith.constant 3.200000e+01 : f32
    %10 = vector.broadcast %cst_8 : f32 to vector<16x1xf32>
    %11 = arith.divf %9, %10 : vector<16x1xf32>
    %12 = vector.broadcast %11 : vector<16x1xf32> to vector<16x32xf32>
    %13 = arith.subf %7, %12 : vector<16x32xf32>
    %14 = arith.mulf %13, %13 : vector<16x32xf32>
    %cst_9 = arith.constant dense<0.000000e+00> : vector<16xf32>
    %15 = vector.multi_reduction <add>, %14, %cst_9 [1] : vector<16x32xf32> to vector<16xf32>
    %16 = vector.shape_cast %15 : vector<16xf32> to vector<16x1xf32>
    %cst_10 = arith.constant 3.200000e+01 : f32
    %17 = vector.broadcast %cst_10 : f32 to vector<16x1xf32>
    %18 = arith.divf %16, %17 : vector<16x1xf32>
    %cst_11 = arith.constant 9.99999974E-6 : f32
    %19 = vector.broadcast %cst_11 : f32 to vector<16x1xf32>
    %20 = arith.addf %18, %19 : vector<16x1xf32>
    %21 = math.rsqrt %20 : vector<16x1xf32>
    %22 = vector.broadcast %21 : vector<16x1xf32> to vector<16x32xf32>
    %23 = arith.mulf %13, %22 : vector<16x32xf32>
    %c0_12 = arith.constant 0 : index
    %c0_13 = arith.constant 0 : index
    %24 = vector.load %arg5[%c0_12, %c0_13] : memref<1x32xf32, #tpu.memory_space<vmem>>, vector<1x32xf32>
    %25 = vector.broadcast %24 : vector<1x32xf32> to vector<16x32xf32>
    %26 = arith.mulf %23, %25 : vector<16x32xf32>
    %c0_14 = arith.constant 0 : index
    %c0_15 = arith.constant 0 : index
    %27 = vector.load %arg6[%c0_14, %c0_15] : memref<1x32xf32, #tpu.memory_space<vmem>>, vector<1x32xf32>
    %28 = vector.broadcast %27 : vector<1x32xf32> to vector<16x32xf32>
    %29 = arith.addf %26, %28 : vector<16x32xf32>
    %c0_16 = arith.constant 0 : index
    %c0_17 = arith.constant 0 : index
    %30 = vector.load %arg7[%c0_16, %c0_17] : memref<16x32xf32, #tpu.memory_space<vmem>>, vector<16x32xf32>
    tpu.vector_store %arg7[%c0_16, %c0_17], %29 {strides = array<i32>} : memref<16x32xf32, #tpu.memory_space<vmem>>, vector<16x32xf32>,
    return
  }
  func.func @transform_0(%arg0: i32) -> (i32, i32) {
    %c0_i32 = arith.constant 0 : i32
    %c0_i32_0 = arith.constant 0 : i32
    return %arg0, %c0_i32 : i32, i32
  }
  func.func @transform_1(%arg0: i32) -> (i32, i32) {
    %c0_i32 = arith.constant 0 : i32
    %c0_i32_0 = arith.constant 0 : i32
    return %arg0, %c0_i32 : i32, i32
  }
  func.func @transform_2(%arg0: i32) -> (i32, i32) {
    %c0_i32 = arith.constant 0 : i32
    %c0_i32_0 = arith.constant 0 : i32
    %c0_i32_1 = arith.constant 0 : i32
    return %c0_i32, %c0_i32_0 : i32, i32
  }
  func.func @transform_3(%arg0: i32) -> (i32, i32) {
    %c0_i32 = arith.constant 0 : i32
    %c0_i32_0 = arith.constant 0 : i32
    %c0_i32_1 = arith.constant 0 : i32
    return %c0_i32, %c0_i32_0 : i32, i32
  }
  func.func @transform_4(%arg0: i32) -> (i32, i32) {
    %c0_i32 = arith.constant 0 : i32
    %c0_i32_0 = arith.constant 0 : i32
    %c0_i32_1 = arith.constant 0 : i32
    return %c0_i32, %c0_i32_0 : i32, i32
  }
  func.func @transform_5(%arg0: i32) -> (i32, i32) {
    %c0_i32 = arith.constant 0 : i32
    %c0_i32_0 = arith.constant 0 : i32
    %c0_i32_1 = arith.constant 0 : i32
    return %c0_i32, %c0_i32_0 : i32, i32
  }
  func.func @transform_6(%arg0: i32) -> (i32, i32) {
    %c0_i32 = arith.constant 0 : i32
    %c0_i32_0 = arith.constant 0 : i32
    return %arg0, %c0_i32 : i32, i32
  }
}

module attributes {stable_mosaic.version = 11 : i64} {
  func.func @_bert_output_kernel(%arg0: i32, %arg1: memref<16x64xf32, #tpu.memory_space<vmem>>, %arg2: memref<16x32xf32, #tpu.memory_space<vmem>>, %arg3: memref<64x32xf32, #tpu.memory_space<vmem>>, %arg4: memref<1x32xf32, #tpu.memory_space<vmem>>, %arg5: memref<1x32xf32, #tpu.memory_space<vmem>>, %arg6: memref<1x32xf32, #tpu.memory_space<vmem>>, %arg7: memref<16x32xf32, #tpu.memory_space<vmem>>) attributes {dimension_semantics = [#tpu.dimension_semantics<parallel>], iteration_bounds = array<i64: 1>, scalar_prefetch = 0 : i64, scratch_operands = 0 : i64, tpu.core_type = #tpu.core_type<tc>, window_params = [{transform_indices = @transform_0, window_bounds = array<i64: 16, 64>}, {transform_indices = @transform_1, window_bounds = array<i64: 16, 32>}, {pipeline_mode = #tpu.pipeline_mode<synchronous>, transform_indices = @transform_2, window_bounds = array<i64: 64, 32>}, {pipeline_mode = #tpu.pipeline_mode<synchronous>, transform_indices = @transform_3, window_bounds = array<i64: 1, 32>}, {pipeline_mode = #tpu.pipeline_mode<synchronous>, transform_indices = @transform_4, window_bounds = array<i64: 1, 32>}, {pipeline_mode = #tpu.pipeline_mode<synchronous>, transform_indices = @transform_5, window_bounds = array<i64: 1, 32>}, {transform_indices = @transform_6, window_bounds = array<i64: 16, 32>}]} {
    %c0 = arith.constant 0 : index
    %c0_0 = arith.constant 0 : index
    %0 = vector.load %arg1[%c0, %c0_0] : memref<16x64xf32, #tpu.memory_space<vmem>>, vector<16x64xf32>
    %c0_1 = arith.constant 0 : index
    %c0_2 = arith.constant 0 : index
    %1 = vector.load %arg3[%c0_1, %c0_2] : memref<64x32xf32, #tpu.memory_space<vmem>>, vector<64x32xf32>
    %cst = arith.constant dense<0.000000e+00> : vector<16x32xf32>
    %2 = tpu.matmul %0, %1, %cst {dimension_numbers = #tpu.dot_dimension_numbers<[1], [0], [0], [1], [0, 0, 1, 1], [], []>} : vector<16x64xf32>, vector<64x32xf32>, vector<16x32xf32> -> vector<16x32xf32>
    %c0_3 = arith.constant 0 : index
    %c0_4 = arith.constant 0 : index
    %3 = vector.load %arg2[%c0_3, %c0_4] : memref<16x32xf32, #tpu.memory_space<vmem>>, vector<16x32xf32>
    %4 = arith.addf %2, %3 : vector<16x32xf32>
    %c0_5 = arith.constant 0 : index
    %c0_6 = arith.constant 0 : index
    %5 = vector.load %arg4[%c0_5, %c0_6] : memref<1x32xf32, #tpu.memory_space<vmem>>, vector<1x32xf32>
    %6 = vector.broadcast %5 : vector<1x32xf32> to vector<16x32xf32>
    %7 = arith.addf %4, %6 : vector<16x32xf32>
    %cst_7 = arith.constant dense<0.000000e+00> : vector<16xf32>
    %8 = vector.multi_reduction <add>, %7, %cst_7 [1] : vector<16x32xf32> to vector<16xf32>
    %9 = vector.shape_cast %8 : vector<16xf32> to vector<16x1xf32>
    %cst_8 = arith.constant 3.200000e+01 : f32
    %10 = vector.broadcast %cst_8 : f32 to vector<16x1xf32>
    %11 = arith.divf %9, %10 : vector<16x1xf32>
    %12 = vector.broadcast %11 : vector<16x1xf32> to vector<16x32xf32>
    %13 = arith.subf %7, %12 : vector<16x32xf32>
    %14 = arith.mulf %13, %13 : vector<16x32xf32>
    %cst_9 = arith.constant dense<0.000000e+00> : vector<16xf32>
    %15 = vector.multi_reduction <add>, %14, %cst_9 [1] : vector<16x32xf32> to vector<16xf32>
    %16 = vector.shape_cast %15 : vector<16xf32> to vector<16x1xf32>
    %cst_10 = arith.constant 3.200000e+01 : f32
    %17 = vector.broadcast %cst_10 : f32 to vector<16x1xf32>
    %18 = arith.divf %16, %17 : vector<16x1xf32>
    %cst_11 = arith.constant 9.99999974E-6 : f32
    %19 = vector.broadcast %cst_11 : f32 to vector<16x1xf32>
    %20 = arith.addf %18, %19 : vector<16x1xf32>
    %21 = math.rsqrt %20 : vector<16x1xf32>
    %22 = vector.broadcast %21 : vector<16x1xf32> to vector<16x32xf32>
    %23 = arith.mulf %13, %22 : vector<16x32xf32>
    %c0_12 = arith.constant 0 : index
    %c0_13 = arith.constant 0 : index
    %24 = vector.load %arg5[%c0_12, %c0_13] : memref<1x32xf32, #tpu.memory_space<vmem>>, vector<1x32xf32>
    %25 = vector.broadcast %24 : vector<1x32xf32> to vector<16x32xf32>
    %26 = arith.mulf %23, %25 : vector<16x32xf32>
    %c0_14 = arith.constant 0 : index
    %c0_15 = arith.constant 0 : index
    %27 = vector.load %arg6[%c0_14, %c0_15] : memref<1x32xf32, #tpu.memory_space<vmem>>, vector<1x32xf32>
    %28 = vector.broadcast %27 : vector<1x32xf32> to vector<16x32xf32>
    %29 = arith.addf %26, %28 : vector<16x32xf32>
    %c0_16 = arith.constant 0 : index
    %c0_17 = arith.constant 0 : index
    %30 = vector.load %arg7[%c0_16, %c0_17] : memref<16x32xf32, #tpu.memory_space<vmem>>, vector<16x32xf32>
    tpu.vector_store %arg7[%c0_16, %c0_17], %29 {strides = array<i32>} : memref<16x32xf32, #tpu.memory_space<vmem>>, vector<16x32xf32>,
    return
  }
  func.func @transform_0(%arg0: i32) -> (i32, i32) {
    %c0_i32 = arith.constant 0 : i32
    %c0_i32_0 = arith.constant 0 : i32
    return %arg0, %c0_i32 : i32, i32
  }
  func.func @transform_1(%arg0: i32) -> (i32, i32) {
    %c0_i32 = arith.constant 0 : i32
    %c0_i32_0 = arith.constant 0 : i32
    return %arg0, %c0_i32 : i32, i32
  }
  func.func @transform_2(%arg0: i32) -> (i32, i32) {
    %c0_i32 = arith.constant 0 : i32
    %c0_i32_0 = arith.constant 0 : i32
    %c0_i32_1 = arith.constant 0 : i32
    return %c0_i32, %c0_i32_0 : i32, i32
  }
  func.func @transform_3(%arg0: i32) -> (i32, i32) {
    %c0_i32 = arith.constant 0 : i32
    %c0_i32_0 = arith.constant 0 : i32
    %c0_i32_1 = arith.constant 0 : i32
    return %c0_i32, %c0_i32_0 : i32, i32
  }
  func.func @transform_4(%arg0: i32) -> (i32, i32) {
    %c0_i32 = arith.constant 0 : i32
    %c0_i32_0 = arith.constant 0 : i32
    %c0_i32_1 = arith.constant 0 : i32
    return %c0_i32, %c0_i32_0 : i32, i32
  }
  func.func @transform_5(%arg0: i32) -> (i32, i32) {
    %c0_i32 = arith.constant 0 : i32
    %c0_i32_0 = arith.constant 0 : i32
    %c0_i32_1 = arith.constant 0 : i32
    return %c0_i32, %c0_i32_0 : i32, i32
  }
  func.func @transform_6(%arg0: i32) -> (i32, i32) {
    %c0_i32 = arith.constant 0 : i32
    %c0_i32_0 = arith.constant 0 : i32
    return %arg0, %c0_i32 : i32, i32
  }
}

</mosaic_0001>

<llo_original>
// kernel: tpu_custom_call.1
$region0: #{tpu_custom_call.1}
  #allocation0 [shape = 'u32[]', space=smem, size = 0x4, offset = 0x4, fixed_abs, tag = 'smem constant byte address 0x4 - core index']
  #allocation1 [shape = 'u32[144,128]{1,0:T(1,128)}', space=vmem, size = 0x12000, scoped, tag = 'internal scratch']
  %s0 = inlined_call_operand.vmem [shape: f32[16,64], index: 0, kind: input, shape index: {}]
  %s1 = inlined_call_operand.vmem [shape: f32[16,32], index: 1, kind: input, shape index: {}]
  %s2 = inlined_call_operand.vmem [shape: f32[64,32], index: 2, kind: input, shape index: {}]
  %s3 = inlined_call_operand.vmem [shape: f32[1,32], index: 3, kind: input, shape index: {}]
  %s4 = inlined_call_operand.vmem [shape: f32[1,32], index: 4, kind: input, shape index: {}]
  %s5 = inlined_call_operand.vmem [shape: f32[1,32], index: 5, kind: input, shape index: {}]
  %s6 = inlined_call_operand.hbm [shape: f32[16,32], index: 6, kind: output, shape index: {}]
  %s7 = sld [smem:[#allocation0]]
  $region34: #{tpu_custom_call.1} parent=0
    _
  %s9 = ssub.s32 1, %s7
  %s10 = scalar_select 0, %s9, %s7
  $region1: #{tpu_custom_call.1} parent=0
    #allocation2 [shape = 'u8[8192]{0}', space=vmem, size = 0x2000, scoped, tag = 'output window, operand 0, single buffered']
    #allocation3 [shape = 's32[1]{0}', space=sflag, size = 0x4, scoped, tag = 'scoped memory for tpu_custom_call.1']
    %11 = vsyncpa [#allocation3], 0
    // Predicated region
    $region2: #{tpu_custom_call.1} parent=1 // pred_check
      _
    $region3: #{tpu_custom_call.1} parent=1 // pred_check_branch
      %13 = sbr.rel (0) target = $region5
    $region4: #{tpu_custom_call.1} parent=1 // pred_region
      _
    $region5: #{tpu_custom_call.1} parent=1 // pred_fallthru
      _
    // Predicated region
    $region6: #{tpu_custom_call.1} parent=1 // pred_check
      _
    $region7: #{tpu_custom_call.1} parent=1 // pred_check_branch
      %15 = sbr.rel (0) target = $region9
    $region8: #{tpu_custom_call.1} parent=1 // pred_region
      _
    $region9: #{tpu_custom_call.1} parent=1 // pred_fallthru
      _
    // Predicated region
    $region10: #{tpu_custom_call.1} parent=1 // pred_check
      _
    $region11: #{tpu_custom_call.1} parent=1 // pred_check_branch
      %17 = sbr.rel (0) target = $region13
    $region12: #{tpu_custom_call.1} parent=1 // pred_region
      _
    $region13: #{tpu_custom_call.1} parent=1 // pred_fallthru
      _
    // Predicated region
    $region14: #{tpu_custom_call.1} parent=1 // pred_check
      _
    $region15: #{tpu_custom_call.1} parent=1 // pred_check_branch
      %19 = sbr.rel (0) target = $region17
    $region16: #{tpu_custom_call.1} parent=1 // pred_region
      _
    $region17: #{tpu_custom_call.1} parent=1 // pred_fallthru
      _
    // Predicated region
    $region18: #{tpu_custom_call.1} parent=1 // pred_check
      _
    $region19: #{tpu_custom_call.1} parent=1 // pred_check_branch
      %21 = sbr.rel (0) target = $region21
    $region20: #{tpu_custom_call.1} parent=1 // pred_region
      _
    $region21: #{tpu_custom_call.1} parent=1 // pred_fallthru
      _
    // Predicated region
    $region22: #{tpu_custom_call.1} parent=1 // pred_check
      _
    $region23: #{tpu_custom_call.1} parent=1 // pred_check_branch
      %23 = sbr.rel (0) target = $region25
    $region24: #{tpu_custom_call.1} parent=1 // pred_region
      _
    $region25: #{tpu_custom_call.1} parent=1 // pred_fallthru
      _
    %v24 = vld [vmem:[%s0] sm:$0xff]
    %v25 = vld [vmem:[%s0 + $0x8] sm:$0xff]
    %v26 = vld [vmem:[%s2] sm:$0xff]
    %v27 = vld [vmem:[%s2 + $0x8] sm:$0xff]
    %v28 = vld [vmem:[%s2 + $0x10] sm:$0xff]
    %v29 = vld [vmem:[%s2 + $0x18] sm:$0xff]
    %v30 = vld [vmem:[%s2 + $0x20] sm:$0xff]
    %v31 = vld [vmem:[%s2 + $0x28] sm:$0xff]
    %v32 = vld [vmem:[%s2 + $0x30] sm:$0xff]
    %v33 = vld [vmem:[%s2 + $0x38] sm:$0xff]
    %v34 = vld [vmem:[%s1] sm:$0xff]
    %v35 = vld [vmem:[%s1 + $0x8] sm:$0xff]
    %vm36 = vcmask 523264
    %v38 = vsel %vm36, %v24, 0
    %v41 = vsel %vm36, %v25, 0
    %43 = vmatprep.subr.mxu0 0.0
    %44 = vmatpush1.msra.mxu0 %v26
    %45 = vmatprep.subr.mxu0 0.0
    %46 = vmatpush1.msra.mxu0 %v27
    %47 = vmatprep.subr.mxu0 0.0
    %48 = vmatpush1.msra.mxu0 %v28
    %49 = vmatprep.subr.mxu0 0.0
    %50 = vmatpush1.msra.mxu0 %v29
    %51 = vmatprep.subr.mxu0 0.0
    %52 = vmatpush1.msra.mxu0 %v30
    %53 = vmatprep.subr.mxu0 0.0
    %54 = vmatpush1.msra.mxu0 %v31
    %55 = vmatprep.subr.mxu0 0.0
    %56 = vmatpush1.msra.mxu0 %v32
    %57 = vmatprep.subr.mxu0 0.0
    %58 = vmatpush1.msra.mxu0 %v33
    %59 = vmatprep.subr.mxu0 0.0
    %60 = vmatpush1.msra.mxu0 0.0
    %61 = vmatprep.subr.mxu0 0.0
    %62 = vmatpush1.msra.mxu0 0.0
    %63 = vmatprep.subr.mxu0 0.0
    %64 = vmatpush1.msra.mxu0 0.0
    %65 = vmatprep.subr.mxu0 0.0
    %66 = vmatpush1.msra.mxu0 0.0
    %67 = vmatprep.subr.mxu0 0.0
    %68 = vmatpush1.msra.mxu0 0.0
    %69 = vmatprep.subr.mxu0 0.0
    %70 = vmatpush1.msra.mxu0 0.0
    %71 = vmatprep.subr.mxu0 0.0
    %72 = vmatpush1.msra.mxu0 0.0
    %73 = vmatprep.subr.mxu0 0.0
    %74 = vmatpush1.msra.mxu0 0.0
    %75 = vmatprep.subr.mxu0 0.0
    %76 = vmatpush1.msra.mxu0 0.0
    %77 = vmatprep.subr.mxu0 0.0
    %78 = vmatpush1.msra.mxu0 0.0
    %79 = vmatprep.subr.mxu0 0.0
    %80 = vmatpush1.msra.mxu0 0.0
    %81 = vmatprep.subr.mxu0 0.0
    %82 = vmatpush1.msra.mxu0 0.0
    %83 = vmatprep.subr.mxu0 0.0
    %84 = vmatpush1.msra.mxu0 0.0
    %85 = vmatprep.subr.mxu0 0.0
    %86 = vmatpush1.msra.mxu0 0.0
    %87 = vmatprep.subr.mxu0 0.0
    %88 = vmatpush1.msra.mxu0 0.0
    %89 = vmatprep.subr.mxu0 0.0
    %90 = vmatpush1.msra.mxu0 0.0
    %91 = vmatprep.subr.mxu0 0.0
    %92 = vmatpush1.msra.mxu0 0.0
    %93 = vmatprep.subr.mxu0 0.0
    %94 = vmatpush1.msra.mxu0 0.0
    %95 = vmatprep.subr.mxu0 0.0
    %96 = vmatpush1.msra.mxu0 0.0
    %97 = vmatprep.subr.mxu0 0.0
    %98 = vmatpush1.msra.mxu0 0.0
    %99 = vmatprep.subr.mxu0 0.0
    %100 = vmatpush1.msra.mxu0 0.0
    %101 = vmatprep.subr.mxu0 0.0
    %102 = vmatpush1.msra.mxu0 0.0
    %103 = vmatprep.subr.mxu0 0.0
    %104 = vmatpush1.msra.mxu0 0.0
    %105 = vmatprep.subr.mxu0 0.0
    %106 = vmatpush1.msra.mxu0 0.0
    %107 = vmatprep.mubr.f32.mxu0 0.0
    %108 = vmatmul.mubr.f32.gmra.mrb[0].mxu0 %v38
    %v109 = vpop.f32.mrb[0].mxu0
    %v110 = vadd.f32 %v34, %v109
    %v111 = vpop.f32.mrb[0].mxu0
    %112 = vmatprep.mubr.f32.mxu0 0.0
    %113 = vmatmul.mubr.f32.gmra.mrb[0].mxu0 %v41
    %v114 = vpop.f32.mrb[0].mxu0
    %v115 = vadd.f32 %v35, %v114
    %v116 = vpop.f32.mrb[0].mxu0
    %117 = vdwg.mxu0
    %v118 = vld [vmem:[%s3] sm:$0x1]
    %v120 = vlaneseq
    %v121 = vshrl.u32 %v120, 7
    %v122 = vsub.s32 0, %v121
    %v123 = vrot.slane %v118, %v122
    %v125 = vadd.f32 %v110, %v123
    %v126 = vadd.f32 %v115, %v123
    %vm127 = vcmask 261120
    %v128 = vsel %vm127, %v125, 0.0
    %129 = vadd.xlane.f32.xlu0 %v128
    %v130 = vpop.xlane.xlu0 %129
    %v131 = vsel %vm127, %v126, 0.0
    %132 = vadd.xlane.f32.xlu0 %v131
    %v133 = vpop.xlane.xlu0 %132
    %v134 = vrcp.pop 32.0
    %v135 = vmul.f32 %v130, %v134
    %v136 = vmul.f32 %v133, %v134
    %v137 = vsub.f32 %v125, %v135
    %v138 = vsub.f32 %v126, %v136
    %v139 = vmul.f32 %v137, %v137
    %v140 = vmul.f32 %v138, %v138
    %v141 = vsel %vm127, %v139, 0.0
    %142 = vadd.xlane.f32.xlu0 %v141
    %v143 = vpop.xlane.xlu0 %142
    %v144 = vsel %vm127, %v140, 0.0
    %145 = vadd.xlane.f32.xlu0 %v144
    %v146 = vpop.xlane.xlu0 %145
    %v147 = vmul.f32 %v143, %v134
    %v148 = vmul.f32 %v146, %v134
    %v149 = vadd.f32 %v147, 1e-05
    %v150 = vadd.f32 %v148, 1e-05
    %v151 = vrsqrt.pop %v149
    %v152 = vrsqrt.pop %v150
    %v153 = vmul.f32 %v137, %v151
    %v154 = vmul.f32 %v138, %v152
    %v155 = vld [vmem:[%s4] sm:$0x1]
    %v157 = vlaneseq
    %v158 = vshrl.u32 %v157, 7
    %v159 = vsub.s32 0, %v158
    %v160 = vrot.slane %v155, %v159
    %v162 = vmul.f32 %v153, %v160
    %v163 = vmul.f32 %v154, %v160
    %v164 = vld [vmem:[%s5] sm:$0x1]
    %v166 = vlaneseq
    %v167 = vshrl.u32 %v166, 7
    %v168 = vsub.s32 0, %v167
    %v169 = vrot.slane %v164, %v168
    %v171 = vadd.f32 %v162, %v169
    %v172 = vadd.f32 %v163, %v169
    %173 = vst.msk [vmem:[#allocation2] sm:$0xff] %vm127, %v171
    %174 = vst.msk [vmem:[#allocation2 + $0x8] sm:$0xff] %vm127, %v172
    // Predicated region
    $region26: #{tpu_custom_call.1} parent=1 // pred_check
      _
    $region27: #{tpu_custom_call.1} parent=1 // pred_check_branch
      %176 = sbr.rel (0) target = $region29
    $region28: #{tpu_custom_call.1} parent=1 // pred_region
      %s178 = ssub.s32 256, 256
      %179 = vsyncadd [#allocation3], %s178
      %s180 = sshll.u32 [#allocation2], 4
      %s181 = int_to_ptr.vmem [resolvable:$true] %s180
      %186 = dma.vmem_to_hbm [thread:$0]  %s181, 256, %s6, [#allocation3], 128, 128, 8
    $region29: #{tpu_custom_call.1} parent=1 // pred_fallthru
      _
    // Predicated region
    $region30: #{tpu_custom_call.1} parent=1 // pred_check
      _
    $region31: #{tpu_custom_call.1} parent=1 // pred_check_branch
      %188 = sbr.rel (0) target = $region33
    $region32: #{tpu_custom_call.1} parent=1 // pred_region
      %189 = dma.done [#allocation3], 256
    $region33: #{tpu_custom_call.1} parent=1 // pred_fallthru
      _
    %190 = vsyncpa [#allocation3], 1

// kernel: tpu_custom_call.1
$region0: #{tpu_custom_call.1}
  #allocation0 [shape = 'u32[]', space=smem, size = 0x4, offset = 0x4, fixed_abs, tag = 'smem constant byte address 0x4 - core index']
  #allocation1 [shape = 'u32[144,128]{1,0:T(1,128)}', space=vmem, size = 0x12000, scoped, tag = 'internal scratch']
  %s0 = inlined_call_operand.vmem [shape: f32[16,64], index: 0, kind: input, shape index: {}]
  %s1 = inlined_call_operand.vmem [shape: f32[16,32], index: 1, kind: input, shape index: {}]
  %s2 = inlined_call_operand.vmem [shape: f32[64,32], index: 2, kind: input, shape index: {}]
  %s3 = inlined_call_operand.vmem [shape: f32[1,32], index: 3, kind: input, shape index: {}]
  %s4 = inlined_call_operand.vmem [shape: f32[1,32], index: 4, kind: input, shape index: {}]
  %s5 = inlined_call_operand.vmem [shape: f32[1,32], index: 5, kind: input, shape index: {}]
  %s6 = inlined_call_operand.hbm [shape: f32[16,32], index: 6, kind: output, shape index: {}]
  %s7 = sld [smem:[#allocation0]]
  $region34: #{tpu_custom_call.1} parent=0
    _
  %s9 = ssub.s32 1, %s7
  %s10 = scalar_select 0, %s9, %s7
  $region1: #{tpu_custom_call.1} parent=0
    #allocation2 [shape = 'u8[8192]{0}', space=vmem, size = 0x2000, scoped, tag = 'output window, operand 0, single buffered']
    #allocation3 [shape = 's32[1]{0}', space=sflag, size = 0x4, scoped, tag = 'scoped memory for tpu_custom_call.1']
    %11 = vsyncpa [#allocation3], 0
    // Predicated region
    $region2: #{tpu_custom_call.1} parent=1 // pred_check
      _
    $region3: #{tpu_custom_call.1} parent=1 // pred_check_branch
      %13 = sbr.rel (0) target = $region5
    $region4: #{tpu_custom_call.1} parent=1 // pred_region
      _
    $region5: #{tpu_custom_call.1} parent=1 // pred_fallthru
      _
    // Predicated region
    $region6: #{tpu_custom_call.1} parent=1 // pred_check
      _
    $region7: #{tpu_custom_call.1} parent=1 // pred_check_branch
      %15 = sbr.rel (0) target = $region9
    $region8: #{tpu_custom_call.1} parent=1 // pred_region
      _
    $region9: #{tpu_custom_call.1} parent=1 // pred_fallthru
      _
    // Predicated region
    $region10: #{tpu_custom_call.1} parent=1 // pred_check
      _
    $region11: #{tpu_custom_call.1} parent=1 // pred_check_branch
      %17 = sbr.rel (0) target = $region13
    $region12: #{tpu_custom_call.1} parent=1 // pred_region
      _
    $region13: #{tpu_custom_call.1} parent=1 // pred_fallthru
      _
    // Predicated region
    $region14: #{tpu_custom_call.1} parent=1 // pred_check
      _
    $region15: #{tpu_custom_call.1} parent=1 // pred_check_branch
      %19 = sbr.rel (0) target = $region17
    $region16: #{tpu_custom_call.1} parent=1 // pred_region
      _
    $region17: #{tpu_custom_call.1} parent=1 // pred_fallthru
      _
    // Predicated region
    $region18: #{tpu_custom_call.1} parent=1 // pred_check
      _
    $region19: #{tpu_custom_call.1} parent=1 // pred_check_branch
      %21 = sbr.rel (0) target = $region21
    $region20: #{tpu_custom_call.1} parent=1 // pred_region
      _
    $region21: #{tpu_custom_call.1} parent=1 // pred_fallthru
      _
    // Predicated region
    $region22: #{tpu_custom_call.1} parent=1 // pred_check
      _
    $region23: #{tpu_custom_call.1} parent=1 // pred_check_branch
      %23 = sbr.rel (0) target = $region25
    $region24: #{tpu_custom_call.1} parent=1 // pred_region
      _
    $region25: #{tpu_custom_call.1} parent=1 // pred_fallthru
      _
    %v24 = vld [vmem:[%s0] sm:$0xff]
    %v25 = vld [vmem:[%s0 + $0x8] sm:$0xff]
    %v26 = vld [vmem:[%s2] sm:$0xff]
    %v27 = vld [vmem:[%s2 + $0x8] sm:$0xff]
    %v28 = vld [vmem:[%s2 + $0x10] sm:$0xff]
    %v29 = vld [vmem:[%s2 + $0x18] sm:$0xff]
    %v30 = vld [vmem:[%s2 + $0x20] sm:$0xff]
    %v31 = vld [vmem:[%s2 + $0x28] sm:$0xff]
    %v32 = vld [vmem:[%s2 + $0x30] sm:$0xff]
    %v33 = vld [vmem:[%s2 + $0x38] sm:$0xff]
    %v34 = vld [vmem:[%s1] sm:$0xff]
    %v35 = vld [vmem:[%s1 + $0x8] sm:$0xff]
    %vm36 = vcmask 523264
    %v38 = vsel %vm36, %v24, 0
    %v41 = vsel %vm36, %v25, 0
    %43 = vmatprep.subr.mxu0 0.0
    %44 = vmatpush1.msra.mxu0 %v26
    %45 = vmatprep.subr.mxu0 0.0
    %46 = vmatpush1.msra.mxu0 %v27
    %47 = vmatprep.subr.mxu0 0.0
    %48 = vmatpush1.msra.mxu0 %v28
    %49 = vmatprep.subr.mxu0 0.0
    %50 = vmatpush1.msra.mxu0 %v29
    %51 = vmatprep.subr.mxu0 0.0
    %52 = vmatpush1.msra.mxu0 %v30
    %53 = vmatprep.subr.mxu0 0.0
    %54 = vmatpush1.msra.mxu0 %v31
    %55 = vmatprep.subr.mxu0 0.0
    %56 = vmatpush1.msra.mxu0 %v32
    %57 = vmatprep.subr.mxu0 0.0
    %58 = vmatpush1.msra.mxu0 %v33
    %59 = vmatprep.subr.mxu0 0.0
    %60 = vmatpush1.msra.mxu0 0.0
    %61 = vmatprep.subr.mxu0 0.0
    %62 = vmatpush1.msra.mxu0 0.0
    %63 = vmatprep.subr.mxu0 0.0
    %64 = vmatpush1.msra.mxu0 0.0
    %65 = vmatprep.subr.mxu0 0.0
    %66 = vmatpush1.msra.mxu0 0.0
    %67 = vmatprep.subr.mxu0 0.0
    %68 = vmatpush1.msra.mxu0 0.0
    %69 = vmatprep.subr.mxu0 0.0
    %70 = vmatpush1.msra.mxu0 0.0
    %71 = vmatprep.subr.mxu0 0.0
    %72 = vmatpush1.msra.mxu0 0.0
    %73 = vmatprep.subr.mxu0 0.0
    %74 = vmatpush1.msra.mxu0 0.0
    %75 = vmatprep.subr.mxu0 0.0
    %76 = vmatpush1.msra.mxu0 0.0
    %77 = vmatprep.subr.mxu0 0.0
    %78 = vmatpush1.msra.mxu0 0.0
    %79 = vmatprep.subr.mxu0 0.0
    %80 = vmatpush1.msra.mxu0 0.0
    %81 = vmatprep.subr.mxu0 0.0
    %82 = vmatpush1.msra.mxu0 0.0
    %83 = vmatprep.subr.mxu0 0.0
    %84 = vmatpush1.msra.mxu0 0.0
    %85 = vmatprep.subr.mxu0 0.0
    %86 = vmatpush1.msra.mxu0 0.0
    %87 = vmatprep.subr.mxu0 0.0
    %88 = vmatpush1.msra.mxu0 0.0
    %89 = vmatprep.subr.mxu0 0.0
    %90 = vmatpush1.msra.mxu0 0.0
    %91 = vmatprep.subr.mxu0 0.0
    %92 = vmatpush1.msra.mxu0 0.0
    %93 = vmatprep.subr.mxu0 0.0
    %94 = vmatpush1.msra.mxu0 0.0
    %95 = vmatprep.subr.mxu0 0.0
    %96 = vmatpush1.msra.mxu0 0.0
    %97 = vmatprep.subr.mxu0 0.0
    %98 = vmatpush1.msra.mxu0 0.0
    %99 = vmatprep.subr.mxu0 0.0
    %100 = vmatpush1.msra.mxu0 0.0
    %101 = vmatprep.subr.mxu0 0.0
    %102 = vmatpush1.msra.mxu0 0.0
    %103 = vmatprep.subr.mxu0 0.0
    %104 = vmatpush1.msra.mxu0 0.0
    %105 = vmatprep.subr.mxu0 0.0
    %106 = vmatpush1.msra.mxu0 0.0
    %107 = vmatprep.mubr.f32.mxu0 0.0
    %108 = vmatmul.mubr.f32.gmra.mrb[0].mxu0 %v38
    %v109 = vpop.f32.mrb[0].mxu0
    %v110 = vadd.f32 %v34, %v109
    %v111 = vpop.f32.mrb[0].mxu0
    %112 = vmatprep.mubr.f32.mxu0 0.0
    %113 = vmatmul.mubr.f32.gmra.mrb[0].mxu0 %v41
    %v114 = vpop.f32.mrb[0].mxu0
    %v115 = vadd.f32 %v35, %v114
    %v116 = vpop.f32.mrb[0].mxu0
    %117 = vdwg.mxu0
    %v118 = vld [vmem:[%s3] sm:$0x1]
    %v120 = vlaneseq
    %v121 = vshrl.u32 %v120, 7
    %v122 = vsub.s32 0, %v121
    %v123 = vrot.slane %v118, %v122
    %v125 = vadd.f32 %v110, %v123
    %v126 = vadd.f32 %v115, %v123
    %vm127 = vcmask 261120
    %v128 = vsel %vm127, %v125, 0.0
    %129 = vadd.xlane.f32.xlu0 %v128
    %v130 = vpop.xlane.xlu0 %129
    %v131 = vsel %vm127, %v126, 0.0
    %132 = vadd.xlane.f32.xlu0 %v131
    %v133 = vpop.xlane.xlu0 %132
    %v134 = vrcp.pop 32.0
    %v135 = vmul.f32 %v130, %v134
    %v136 = vmul.f32 %v133, %v134
    %v137 = vsub.f32 %v125, %v135
    %v138 = vsub.f32 %v126, %v136
    %v139 = vmul.f32 %v137, %v137
    %v140 = vmul.f32 %v138, %v138
    %v141 = vsel %vm127, %v139, 0.0
    %142 = vadd.xlane.f32.xlu0 %v141
    %v143 = vpop.xlane.xlu0 %142
    %v144 = vsel %vm127, %v140, 0.0
    %145 = vadd.xlane.f32.xlu0 %v144
    %v146 = vpop.xlane.xlu0 %145
    %v147 = vmul.f32 %v143, %v134
    %v148 = vmul.f32 %v146, %v134
    %v149 = vadd.f32 %v147, 1e-05
    %v150 = vadd.f32 %v148, 1e-05
    %v151 = vrsqrt.pop %v149
    %v152 = vrsqrt.pop %v150
    %v153 = vmul.f32 %v137, %v151
    %v154 = vmul.f32 %v138, %v152
    %v155 = vld [vmem:[%s4] sm:$0x1]
    %v157 = vlaneseq
    %v158 = vshrl.u32 %v157, 7
    %v159 = vsub.s32 0, %v158
    %v160 = vrot.slane %v155, %v159
    %v162 = vmul.f32 %v153, %v160
    %v163 = vmul.f32 %v154, %v160
    %v164 = vld [vmem:[%s5] sm:$0x1]
    %v166 = vlaneseq
    %v167 = vshrl.u32 %v166, 7
    %v168 = vsub.s32 0, %v167
    %v169 = vrot.slane %v164, %v168
    %v171 = vadd.f32 %v162, %v169
    %v172 = vadd.f32 %v163, %v169
    %173 = vst.msk [vmem:[#allocation2] sm:$0xff] %vm127, %v171
    %174 = vst.msk [vmem:[#allocation2 + $0x8] sm:$0xff] %vm127, %v172
    // Predicated region
    $region26: #{tpu_custom_call.1} parent=1 // pred_check
      _
    $region27: #{tpu_custom_call.1} parent=1 // pred_check_branch
      %176 = sbr.rel (0) target = $region29
    $region28: #{tpu_custom_call.1} parent=1 // pred_region
      %s178 = ssub.s32 256, 256
      %179 = vsyncadd [#allocation3], %s178
      %s180 = sshll.u32 [#allocation2], 4
      %s181 = int_to_ptr.vmem [resolvable:$true] %s180
      %186 = dma.vmem_to_hbm [thread:$0]  %s181, 256, %s6, [#allocation3], 128, 128, 8
    $region29: #{tpu_custom_call.1} parent=1 // pred_fallthru
      _
    // Predicated region
    $region30: #{tpu_custom_call.1} parent=1 // pred_check
      _
    $region31: #{tpu_custom_call.1} parent=1 // pred_check_branch
      %188 = sbr.rel (0) target = $region33
    $region32: #{tpu_custom_call.1} parent=1 // pred_region
      %189 = dma.done [#allocation3], 256
    $region33: #{tpu_custom_call.1} parent=1 // pred_fallthru
      _
    %190 = vsyncpa [#allocation3], 1

</llo_original>
